<compile_context>
chip_gen: v5e
topology: v5e:2x2
jax: 0.10.0
libtpu: 0.0.40
codegen_flags: <defaults>
</compile_context>

<pallas_src>
import functools
import math

import jax
import jax.numpy as jnp
from jax.experimental import pallas as pl
from jax.experimental.pallas import tpu as pltpu


def _round_up(v, m):
    return ((v + m - 1) // m) * m


# -----------------------------------------------------------------------------
# Fused EncoderLayer body kernel
# -----------------------------------------------------------------------------
def encoder_layer_kernel(newx_ref, xres_ref,
                         g1_ref, b1_ref,
                         w1_ref, c1b_ref,
                         w2_ref, c2b_ref,
                         g2_ref, b2_ref,
                         out_ref, *, inv_d, d_true, gelu_bf16):
    eps = jnp.float32(1e-5)
    inv_d = jnp.float32(inv_d)

    # x = new_x + x_res            (dropout is identity in eval mode)
    x = newx_ref[...] + xres_ref[...]                        # (TM, Dp) f32
    dp = x.shape[-1]

    if d_true != dp:
        # lane-validity mask for the zero-padded feature lanes
        lane = jax.lax.broadcasted_iota(jnp.int32, x.shape, dimension=1)
        valid = lane < d_true
    else:
        valid = None

    def layer_norm(v, g, b):
        # two-pass LN (biased variance, eps=1e-5); padded lanes of v are zero,
        # and are masked out of the centered sum so stats match torch exactly.
        mu = jnp.sum(v, axis=-1, keepdims=True) * inv_d
        c = v - mu
        if valid is not None:
            c = jnp.where(valid, c, 0.0)
        var = jnp.sum(c * c, axis=-1, keepdims=True) * inv_d
        # gamma/beta are zero in padded lanes -> result padded lanes stay 0
        return c * jax.lax.rsqrt(var + eps) * g + b

    # ---- LayerNorm 1 ----
    x1 = layer_norm(x, g1_ref[...], b1_ref[...])             # (TM, Dp) f32

    # ---- FFN: conv1 (1x1) -> exact GELU -> conv2 (1x1) ----
    y = jnp.dot(x1.astype(jnp.bfloat16), w1_ref[...],
                preferred_element_type=jnp.float32)          # (TM, Fp) f32
    gdt = jnp.bfloat16 if gelu_bf16 else jnp.float32
    y = y.astype(gdt) + c1b_ref[...]                         # bias in gelu dtype
    # exact (erf-based) GELU, matching torch.nn.functional.gelu default
    y = 0.5 * y * (1.0 + jax.lax.erf(y * 0.7071067811865476))
    y = jnp.dot(y.astype(jnp.bfloat16), w2_ref[...],
                preferred_element_type=jnp.float32) + c2b_ref[...]

    # ---- residual + LayerNorm 2 ----
    z = x1 + y                                               # padded lanes stay 0
    out_ref[...] = layer_norm(z, g2_ref[...], b2_ref[...])


def encoder_layer_body(new_x, x_res, params):
    """new_x, x_res: (B, L, D) float32.  Runs the fused, tiled Pallas kernel."""
    B, L, D = x_res.shape
    N = B * L
    d_ff = params["conv1_w"].shape[1]

    LANE = 128
    Dp = _round_up(D, LANE)
    Fp = _round_up(d_ff, LANE)

    # Row tile: 8-aligned, capped at 512, and <= ~N/2 so the grid has >= 2
    # steps (lets "parallel" shard across v7x's two TensorCores).
    TM = min(512, max(8, _round_up((N + 1) // 2, 8)))
    grid = (pl.cdiv(N, TM),)

    # GELU dtype: bf16 on chips with a bf16 VPU (v6e/v7x), f32 on v5.
    try:
        is_v5 = "v5" in jax.devices()[0].device_kind.lower()
    except Exception:  # pragma: no cover - defensive
        is_v5 = False
    gelu_bf16 = not is_v5
    gelu_dtype = jnp.bfloat16 if gelu_bf16 else jnp.float32

    # Activations: no row padding (partial last block is masked by Pallas);
    # lane padding only when D is not a 128-multiple.
    nx = new_x.reshape(N, D).astype(jnp.float32)
    xr = x_res.reshape(N, D).astype(jnp.float32)
    if Dp != D:
        nx = jnp.pad(nx, ((0, 0), (0, Dp - D)))
        xr = jnp.pad(xr, ((0, 0), (0, Dp - D)))

    def pad2(a, rows, cols):
        if a.shape == (rows, cols):
            return a
        return jnp.pad(a, ((0, rows - a.shape[0]), (0, cols - a.shape[1])))

    g1 = pad2(params["norm1_g"], 1, Dp)
    b1 = pad2(params["norm1_b"], 1, Dp)
    g2 = pad2(params["norm2_g"], 1, Dp)
    b2 = pad2(params["norm2_b"], 1, Dp)
    w1 = pad2(params["conv1_w"], Dp, Fp).astype(jnp.bfloat16)
    c1b = pad2(params["conv1_b"], 1, Fp).astype(gelu_dtype)
    w2 = pad2(params["conv2_w"], Fp, Dp).astype(jnp.bfloat16)
    c2b = pad2(params["conv2_b"], 1, Dp)

    kernel = functools.partial(encoder_layer_kernel,
                               inv_d=1.0 / D, d_true=D, gelu_bf16=gelu_bf16)

    row_spec = pl.BlockSpec((TM, Dp), lambda i: (i, 0))

    def const_spec(shape):
        return pl.BlockSpec(shape, lambda i: (0, 0))   # VMEM-resident across grid

    out = pl.pallas_call(
        kernel,
        out_shape=jax.ShapeDtypeStruct((N, Dp), jnp.float32),
        grid=grid,
        in_specs=[
            row_spec, row_spec,
            const_spec((1, Dp)), const_spec((1, Dp)),
            const_spec((Dp, Fp)), const_spec((1, Fp)),
            const_spec((Fp, Dp)), const_spec((1, Dp)),
            const_spec((1, Dp)), const_spec((1, Dp)),
        ],
        out_specs=row_spec,
        input_output_aliases={0: 0},          # new_x buffer is dead after the kernel
        compiler_params=pltpu.CompilerParams(
            dimension_semantics=("parallel",),   # shard rows across TCs on v7x
            vmem_limit_bytes=48 * 1024 * 1024,
        ),
    )(nx, xr, g1, b1, w1, c1b, w2, c2b, g2, b2)

    if Dp != D:
        out = out[:, :D]
    return out.reshape(B, L, D)


# -----------------------------------------------------------------------------
# Mamba (S6) block in plain JAX — injected sub-module of EncoderLayer.
# TODO(synk): the selective scan is inherently sequential over L; it stays a
# (vmapped) lax.scan rather than a Pallas kernel.
# -----------------------------------------------------------------------------
def init_mamba_params(key, d_model, d_state=8, d_conv=4, expand=2):
    d_inner = expand * d_model
    dt_rank = max(1, math.ceil(d_model / 16))
    ks = jax.random.split(key, 7)
    s = 0.1
    p = {
        "in_proj":   s * jax.random.normal(ks[0], (d_model, 2 * d_inner), jnp.float32),
        "conv_w":    s * jax.random.normal(ks[1], (d_inner, d_conv), jnp.float32),
        "conv_b":    s * jax.random.normal(ks[2], (d_inner,), jnp.float32),
        "x_proj":    s * jax.random.normal(ks[3], (d_inner, dt_rank + 2 * d_state), jnp.float32),
        "dt_proj_w": s * jax.random.normal(ks[4], (dt_rank, d_inner), jnp.float32),
        "dt_proj_b": s * jax.random.normal(ks[5], (d_inner,), jnp.float32),
        "A_log":     jnp.log(jnp.broadcast_to(
                         jnp.arange(1, d_state + 1, dtype=jnp.float32),
                         (d_inner, d_state))),
        "D":         jnp.ones((d_inner,), jnp.float32),
        "out_proj":  s * jax.random.normal(ks[6], (d_inner, d_model), jnp.float32),
    }
    return p, dt_rank, d_state


def mamba_forward(x, p, dt_rank, d_state):
    """x: (B, L, d_model) -> (B, L, d_model)"""
    B, L, _ = x.shape
    d_inner, d_conv = p["conv_w"].shape

    xz = x @ p["in_proj"]                          # (B, L, 2*d_inner)
    xin, z = jnp.split(xz, 2, axis=-1)

    # depthwise causal conv1d along L
    xpad = jnp.pad(xin, ((0, 0), (d_conv - 1, 0), (0, 0)))
    xc = p["conv_b"]
    for k in range(d_conv):
        xc = xc + xpad[:, k:k + L, :] * p["conv_w"][:, k]
    xc = jax.nn.silu(xc)                           # (B, L, d_inner)

    xdbl = xc @ p["x_proj"]                        # (B, L, dt_rank + 2*d_state)
    dt, Bm, Cm = jnp.split(xdbl, [dt_rank, dt_rank + d_state], axis=-1)
    dt = jax.nn.softplus(dt @ p["dt_proj_w"] + p["dt_proj_b"])   # (B, L, d_inner)
    A = -jnp.exp(p["A_log"])                       # (d_inner, d_state)

    def step(h, inp):
        dt_t, B_t, C_t, x_t = inp                  # (B,di) (B,ds) (B,ds) (B,di)
        dA = jnp.exp(dt_t[..., None] * A)          # (B, di, ds)
        dBx = dt_t[..., None] * B_t[:, None, :] * x_t[..., None]
        h = dA * h + dBx
        y = jnp.einsum("bds,bs->bd", h, C_t)
        return h, y

    h0 = jnp.zeros((B, d_inner, d_state), jnp.float32)
    seq = (jnp.moveaxis(dt, 1, 0), jnp.moveaxis(Bm, 1, 0),
           jnp.moveaxis(Cm, 1, 0), jnp.moveaxis(xc, 1, 0))
    _, ys = jax.lax.scan(step, h0, seq)
    y = jnp.moveaxis(ys, 0, 1)                     # (B, L, d_inner)

    y = y + xc * p["D"]
    y = y * jax.nn.silu(z)
    return y @ p["out_proj"]                       # (B, L, d_model)


def mamba_dual_forward(x, p1, p2, dt_rank, d_state):
    """Run mamba1(x) + flip(mamba2(flip(x))) as a single vmapped scan."""
    xs = jnp.stack([x, jnp.flip(x, axis=1)], axis=0)              # (2, B, L, D)
    ps = jax.tree_util.tree_map(lambda a, b: jnp.stack([a, b], 0), p1, p2)
    ys = jax.vmap(mamba_forward, in_axes=(0, 0, None, None))(xs, ps, dt_rank, d_state)
    return ys[0] + jnp.flip(ys[1], axis=1)


# -----------------------------------------------------------------------------
# EncoderLayer forward (eval mode: dropout == identity)
# -----------------------------------------------------------------------------
def init_encoder_layer_params(key, d_model, d_ff):
    ks = jax.random.split(key, 4)
    s = 0.1
    return {
        # conv1: Conv1d(d_model -> d_ff, k=1)  stored as (d_model, d_ff) matmul weight
        "conv1_w": s * jax.random.normal(ks[0], (d_model, d_ff), jnp.float32),
        "conv1_b": s * jax.random.normal(ks[1], (1, d_ff), jnp.float32),
        # conv2: Conv1d(d_ff -> d_model, k=1)
        "conv2_w": s * jax.random.normal(ks[2], (d_ff, d_model), jnp.float32),
        "conv2_b": s * jax.random.normal(ks[3], (1, d_model), jnp.float32),
        # LayerNorm default init (weight=1, bias=0)
        "norm1_g": jnp.ones((1, d_model), jnp.float32),
        "norm1_b": jnp.zeros((1, d_model), jnp.float32),
        "norm2_g": jnp.ones((1, d_model), jnp.float32),
        "norm2_b": jnp.zeros((1, d_model), jnp.float32),
    }


def encoder_layer_forward(x, layer_p, m1_p, m2_p, dt_rank, d_state):
    # TODO(synk): dropout is modeled in eval mode (identity); training-mode RNG
    # dropout masks are not implemented.
    x_res = x
    new_x = mamba_dual_forward(x, m1_p, m2_p, dt_rank, d_state)
    return encoder_layer_body(new_x, x_res, layer_p)


if __name__ == "__main__":
    B, L, d_model, d_ff = 2, 8, 32, 64

    key = jax.random.PRNGKey(0)
    k_x, k_m1, k_m2, k_layer = jax.random.split(key, 4)

    x = jax.random.normal(k_x, (B, L, d_model), jnp.float32)

    m1_p, dt_rank, d_state = init_mamba_params(k_m1, d_model)
    m2_p, _, _ = init_mamba_params(k_m2, d_model)
    layer_p = init_encoder_layer_params(k_layer, d_model, d_ff)

    fwd = jax.jit(lambda xx: encoder_layer_forward(
        xx, layer_p, m1_p, m2_p, dt_rank, d_state))
    out = fwd(x)
    jax.block_until_ready(out)

    assert out.shape == (B, L, d_model)
    assert jnp.all(jnp.isfinite(out))
    print("KERNEL_OK")
</pallas_src>

<mosaic_0001>
module attributes {stable_mosaic.version = 11 : i64} {
  func.func @encoder_layer_kernel(%arg0: i32, %arg1: memref<8x128xf32, #tpu.memory_space<vmem>>, %arg2: memref<8x128xf32, #tpu.memory_space<vmem>>, %arg3: memref<1x128xf32, #tpu.memory_space<vmem>>, %arg4: memref<1x128xf32, #tpu.memory_space<vmem>>, %arg5: memref<128x128xbf16, #tpu.memory_space<vmem>>, %arg6: memref<1x128xbf16, #tpu.memory_space<vmem>>, %arg7: memref<128x128xbf16, #tpu.memory_space<vmem>>, %arg8: memref<1x128xf32, #tpu.memory_space<vmem>>, %arg9: memref<1x128xf32, #tpu.memory_space<vmem>>, %arg10: memref<1x128xf32, #tpu.memory_space<vmem>>, %arg11: memref<8x128xf32, #tpu.memory_space<vmem>>) attributes {dimension_semantics = [#tpu.dimension_semantics<parallel>], iteration_bounds = array<i64: 2>, scalar_prefetch = 0 : i64, scratch_operands = 0 : i64, tpu.core_type = #tpu.core_type<tc>, window_params = [{transform_indices = @transform_0, window_bounds = array<i64: 8, 128>}, {transform_indices = @transform_1, window_bounds = array<i64: 8, 128>}, {pipeline_mode = #tpu.pipeline_mode<synchronous>, transform_indices = @transform_2, window_bounds = array<i64: 1, 128>}, {pipeline_mode = #tpu.pipeline_mode<synchronous>, transform_indices = @transform_3, window_bounds = array<i64: 1, 128>}, {pipeline_mode = #tpu.pipeline_mode<synchronous>, transform_indices = @transform_4, window_bounds = array<i64: 128, 128>}, {pipeline_mode = #tpu.pipeline_mode<synchronous>, transform_indices = @transform_5, window_bounds = array<i64: 1, 128>}, {pipeline_mode = #tpu.pipeline_mode<synchronous>, transform_indices = @transform_6, window_bounds = array<i64: 128, 128>}, {pipeline_mode = #tpu.pipeline_mode<synchronous>, transform_indices = @transform_7, window_bounds = array<i64: 1, 128>}, {pipeline_mode = #tpu.pipeline_mode<synchronous>, transform_indices = @transform_8, window_bounds = array<i64: 1, 128>}, {pipeline_mode = #tpu.pipeline_mode<synchronous>, transform_indices = @transform_9, window_bounds = array<i64: 1, 128>}, {transform_indices = @transform_10, window_bounds = array<i64: 8, 128>}]} {
    %c0 = arith.constant 0 : index
    %c0_0 = arith.constant 0 : index
    %0 = vector.load %arg1[%c0, %c0_0] : memref<8x128xf32, #tpu.memory_space<vmem>>, vector<8x128xf32>
    %c0_1 = arith.constant 0 : index
    %c0_2 = arith.constant 0 : index
    %1 = vector.load %arg2[%c0_1, %c0_2] : memref<8x128xf32, #tpu.memory_space<vmem>>, vector<8x128xf32>
    %2 = arith.addf %0, %1 : vector<8x128xf32>
    %3 = tpu.iota {dimensions = array<i32: 1>} : vector<8x128xi32>
    %c32_i32 = arith.constant 32 : i32
    %4 = vector.broadcast %c32_i32 : i32 to vector<8x128xi32>
    %5 = arith.cmpi slt, %3, %4 : vector<8x128xi32>
    %c0_3 = arith.constant 0 : index
    %c0_4 = arith.constant 0 : index
    %6 = vector.load %arg3[%c0_3, %c0_4] : memref<1x128xf32, #tpu.memory_space<vmem>>, vector<1x128xf32>
    %c0_5 = arith.constant 0 : index
    %c0_6 = arith.constant 0 : index
    %7 = vector.load %arg4[%c0_5, %c0_6] : memref<1x128xf32, #tpu.memory_space<vmem>>, vector<1x128xf32>
    %cst = arith.constant dense<0.000000e+00> : vector<8xf32>
    %8 = vector.multi_reduction <add>, %2, %cst [1] : vector<8x128xf32> to vector<8xf32>
    %9 = vector.shape_cast %8 : vector<8xf32> to vector<8x1xf32>
    %cst_7 = arith.constant 3.125000e-02 : f32
    %10 = vector.broadcast %cst_7 : f32 to vector<8x1xf32>
    %11 = arith.mulf %9, %10 : vector<8x1xf32>
    %12 = vector.broadcast %11 : vector<8x1xf32> to vector<8x128xf32>
    %13 = arith.subf %2, %12 : vector<8x128xf32>
    %cst_8 = arith.constant 0.000000e+00 : f32
    %14 = vector.broadcast %cst_8 : f32 to vector<8x128xf32>
    %15 = arith.select %5, %13, %14 : vector<8x128xi1>, vector<8x128xf32>
    %16 = arith.mulf %15, %15 : vector<8x128xf32>
    %cst_9 = arith.constant dense<0.000000e+00> : vector<8xf32>
    %17 = vector.multi_reduction <add>, %16, %cst_9 [1] : vector<8x128xf32> to vector<8xf32>
    %18 = vector.shape_cast %17 : vector<8xf32> to vector<8x1xf32>
    %cst_10 = arith.constant 3.125000e-02 : f32
    %19 = vector.broadcast %cst_10 : f32 to vector<8x1xf32>
    %20 = arith.mulf %18, %19 : vector<8x1xf32>
    %cst_11 = arith.constant 9.99999974E-6 : f32
    %21 = vector.broadcast %cst_11 : f32 to vector<8x1xf32>
    %22 = arith.addf %20, %21 : vector<8x1xf32>
    %23 = math.rsqrt %22 : vector<8x1xf32>
    %24 = vector.broadcast %23 : vector<8x1xf32> to vector<8x128xf32>
    %25 = arith.mulf %15, %24 : vector<8x128xf32>
    %26 = vector.broadcast %6 : vector<1x128xf32> to vector<8x128xf32>
    %27 = arith.mulf %25, %26 : vector<8x128xf32>
    %28 = vector.broadcast %7 : vector<1x128xf32> to vector<8x128xf32>
    %29 = arith.addf %27, %28 : vector<8x128xf32>
    %30 = arith.truncf %29 : vector<8x128xf32> to vector<8x128xbf16>
    %c0_12 = arith.constant 0 : index
    %c0_13 = arith.constant 0 : index
    %31 = vector.load %arg5[%c0_12, %c0_13] : memref<128x128xbf16, #tpu.memory_space<vmem>>, vector<128x128xbf16>
    %cst_14 = arith.constant dense<0.000000e+00> : vector<8x128xf32>
    %32 = tpu.matmul %30, %31, %cst_14 {dimension_numbers = #tpu.dot_dimension_numbers<[1], [0], [0], [1], [0, 0, 1, 1], [], []>} : vector<8x128xbf16>, vector<128x128xbf16>, vector<8x128xf32> -> vector<8x128xf32>
    %33 = arith.truncf %32 : vector<8x128xf32> to vector<8x128xbf16>
    %c0_15 = arith.constant 0 : index
    %c0_16 = arith.constant 0 : index
    %34 = vector.load %arg6[%c0_15, %c0_16] : memref<1x128xbf16, #tpu.memory_space<vmem>>, vector<1x128xbf16>
    %35 = vector.broadcast %34 : vector<1x128xbf16> to vector<8x128xbf16>
    %36 = arith.addf %33, %35 : vector<8x128xbf16>
    %cst_17 = arith.constant 5.000000e-01 : bf16
    %37 = vector.broadcast %cst_17 : bf16 to vector<8x128xbf16>
    %38 = arith.mulf %37, %36 : vector<8x128xbf16>
    %cst_18 = arith.constant 7.070310e-01 : bf16
    %39 = vector.broadcast %cst_18 : bf16 to vector<8x128xbf16>
    %40 = arith.mulf %36, %39 : vector<8x128xbf16>
    %41 = math.erf %40 : vector<8x128xbf16>
    %cst_19 = arith.constant 1.000000e+00 : bf16
    %42 = vector.broadcast %cst_19 : bf16 to vector<8x128xbf16>
    %43 = arith.addf %42, %41 : vector<8x128xbf16>
    %44 = arith.mulf %38, %43 : vector<8x128xbf16>
    %c0_20 = arith.constant 0 : index
    %c0_21 = arith.constant 0 : index
    %45 = vector.load %arg7[%c0_20, %c0_21] : memref<128x128xbf16, #tpu.memory_space<vmem>>, vector<128x128xbf16>
    %cst_22 = arith.constant dense<0.000000e+00> : vector<8x128xf32>
    %46 = tpu.matmul %44, %45, %cst_22 {dimension_numbers = #tpu.dot_dimension_numbers<[1], [0], [0], [1], [0, 0, 1, 1], [], []>} : vector<8x128xbf16>, vector<128x128xbf16>, vector<8x128xf32> -> vector<8x128xf32>
    %c0_23 = arith.constant 0 : index
    %c0_24 = arith.constant 0 : index
    %47 = vector.load %arg8[%c0_23, %c0_24] : memref<1x128xf32, #tpu.memory_space<vmem>>, vector<1x128xf32>
    %48 = vector.broadcast %47 : vector<1x128xf32> to vector<8x128xf32>
    %49 = arith.addf %46, %48 : vector<8x128xf32>
    %50 = arith.addf %29, %49 : vector<8x128xf32>
    %c0_25 = arith.constant 0 : index
    %c0_26 = arith.constant 0 : index
    %51 = vector.load %arg9[%c0_25, %c0_26] : memref<1x128xf32, #tpu.memory_space<vmem>>, vector<1x128xf32>
    %c0_27 = arith.constant 0 : index
    %c0_28 = arith.constant 0 : index
    %52 = vector.load %arg10[%c0_27, %c0_28] : memref<1x128xf32, #tpu.memory_space<vmem>>, vector<1x128xf32>
    %cst_29 = arith.constant dense<0.000000e+00> : vector<8xf32>
    %53 = vector.multi_reduction <add>, %50, %cst_29 [1] : vector<8x128xf32> to vector<8xf32>
    %54 = vector.shape_cast %53 : vector<8xf32> to vector<8x1xf32>
    %cst_30 = arith.constant 3.125000e-02 : f32
    %55 = vector.broadcast %cst_30 : f32 to vector<8x1xf32>
    %56 = arith.mulf %54, %55 : vector<8x1xf32>
    %57 = vector.broadcast %56 : vector<8x1xf32> to vector<8x128xf32>
    %58 = arith.subf %50, %57 : vector<8x128xf32>
    %cst_31 = arith.constant 0.000000e+00 : f32
    %59 = vector.broadcast %cst_31 : f32 to vector<8x128xf32>
    %60 = arith.select %5, %58, %59 : vector<8x128xi1>, vector<8x128xf32>
    %61 = arith.mulf %60, %60 : vector<8x128xf32>
    %cst_32 = arith.constant dense<0.000000e+00> : vector<8xf32>
    %62 = vector.multi_reduction <add>, %61, %cst_32 [1] : vector<8x128xf32> to vector<8xf32>
    %63 = vector.shape_cast %62 : vector<8xf32> to vector<8x1xf32>
    %cst_33 = arith.constant 3.125000e-02 : f32
    %64 = vector.broadcast %cst_33 : f32 to vector<8x1xf32>
    %65 = arith.mulf %63, %64 : vector<8x1xf32>
    %cst_34 = arith.constant 9.99999974E-6 : f32
    %66 = vector.broadcast %cst_34 : f32 to vector<8x1xf32>
    %67 = arith.addf %65, %66 : vector<8x1xf32>
    %68 = math.rsqrt %67 : vector<8x1xf32>
    %69 = vector.broadcast %68 : vector<8x1xf32> to vector<8x128xf32>
    %70 = arith.mulf %60, %69 : vector<8x128xf32>
    %71 = vector.broadcast %51 : vector<1x128xf32> to vector<8x128xf32>
    %72 = arith.mulf %70, %71 : vector<8x128xf32>
    %73 = vector.broadcast %52 : vector<1x128xf32> to vector<8x128xf32>
    %74 = arith.addf %72, %73 : vector<8x128xf32>
    %c0_35 = arith.constant 0 : index
    %c0_36 = arith.constant 0 : index
    %75 = vector.load %arg11[%c0_35, %c0_36] : memref<8x128xf32, #tpu.memory_space<vmem>>, vector<8x128xf32>
    tpu.vector_store %arg11[%c0_35, %c0_36], %74 {strides = array<i32>} : memref<8x128xf32, #tpu.memory_space<vmem>>, vector<8x128xf32>,
    return
  }
  func.func @transform_0(%arg0: i32) -> (i32, i32) {
    %c0_i32 = arith.constant 0 : i32
    %c0_i32_0 = arith.constant 0 : i32
    return %arg0, %c0_i32 : i32, i32
  }
  func.func @transform_1(%arg0: i32) -> (i32, i32) {
    %c0_i32 = arith.constant 0 : i32
    %c0_i32_0 = arith.constant 0 : i32
    return %arg0, %c0_i32 : i32, i32
  }
  func.func @transform_2(%arg0: i32) -> (i32, i32) {
    %c0_i32 = arith.constant 0 : i32
    %c0_i32_0 = arith.constant 0 : i32
    %c0_i32_1 = arith.constant 0 : i32
    return %c0_i32, %c0_i32_0 : i32, i32
  }
  func.func @transform_3(%arg0: i32) -> (i32, i32) {
    %c0_i32 = arith.constant 0 : i32
    %c0_i32_0 = arith.constant 0 : i32
    %c0_i32_1 = arith.constant 0 : i32
    return %c0_i32, %c0_i32_0 : i32, i32
  }
  func.func @transform_4(%arg0: i32) -> (i32, i32) {
    %c0_i32 = arith.constant 0 : i32
    %c0_i32_0 = arith.constant 0 : i32
    %c0_i32_1 = arith.constant 0 : i32
    return %c0_i32, %c0_i32_0 : i32, i32
  }
  func.func @transform_5(%arg0: i32) -> (i32, i32) {
    %c0_i32 = arith.constant 0 : i32
    %c0_i32_0 = arith.constant 0 : i32
    %c0_i32_1 = arith.constant 0 : i32
    return %c0_i32, %c0_i32_0 : i32, i32
  }
  func.func @transform_6(%arg0: i32) -> (i32, i32) {
    %c0_i32 = arith.constant 0 : i32
    %c0_i32_0 = arith.constant 0 : i32
    %c0_i32_1 = arith.constant 0 : i32
    return %c0_i32, %c0_i32_0 : i32, i32
  }
  func.func @transform_7(%arg0: i32) -> (i32, i32) {
    %c0_i32 = arith.constant 0 : i32
    %c0_i32_0 = arith.constant 0 : i32
    %c0_i32_1 = arith.constant 0 : i32
    return %c0_i32, %c0_i32_0 : i32, i32
  }
  func.func @transform_8(%arg0: i32) -> (i32, i32) {
    %c0_i32 = arith.constant 0 : i32
    %c0_i32_0 = arith.constant 0 : i32
    %c0_i32_1 = arith.constant 0 : i32
    return %c0_i32, %c0_i32_0 : i32, i32
  }
  func.func @transform_9(%arg0: i32) -> (i32, i32) {
    %c0_i32 = arith.constant 0 : i32
    %c0_i32_0 = arith.constant 0 : i32
    %c0_i32_1 = arith.constant 0 : i32
    return %c0_i32, %c0_i32_0 : i32, i32
  }
  func.func @transform_10(%arg0: i32) -> (i32, i32) {
    %c0_i32 = arith.constant 0 : i32
    %c0_i32_0 = arith.constant 0 : i32
    return %arg0, %c0_i32 : i32, i32
  }
}

</mosaic_0001>

<llo_original>
// kernel: custom-call
$region0: #{custom-call}
  %s0 = inlined_call_operand.vmem [shape: f32[2,2,64,8], index: 0, kind: output, shape index: {}]

// kernel: custom-call.1
$region0: #{custom-call.1}
  %s0 = inlined_call_operand.vmem [shape: f32[8,2,2,64], index: 0, kind: output, shape index: {}]

// kernel: _lambda_.1
$region0: #{_lambda_.1}
  #allocation0 [shape = 'u32[]', space=smem, size = 0x4, offset = 0x4, fixed_abs, tag = 'smem constant byte address 0x4 - core index']
  #allocation1 [shape = 'u32[72,128]{1,0:T(1,128)}', space=vmem, size = 0x9000, scoped, tag = 'internal scratch']
  %s0 = inlined_call_operand.vmem [shape: f32[16,128], index: 0, kind: input, shape index: {}, may-alias: {0,10}]
  %s1 = inlined_call_operand.vmem [shape: f32[16,128], index: 1, kind: input, shape index: {}]
  %s2 = inlined_call_operand.vmem [shape: f32[1,128], index: 2, kind: input, shape index: {}, may-alias: {2,8}]
  %s3 = inlined_call_operand.vmem [shape: f32[1,128], index: 3, kind: input, shape index: {}, may-alias: {3,9}]
  %s4 = inlined_call_operand.vmem [shape: bf16[128,128], index: 4, kind: input, shape index: {}]
  %s5 = inlined_call_operand.vmem [shape: bf16[1,128], index: 5, kind: input, shape index: {}]
  %s6 = inlined_call_operand.vmem [shape: bf16[128,128], index: 6, kind: input, shape index: {}]
  %s7 = inlined_call_operand.vmem [shape: f32[1,128], index: 7, kind: input, shape index: {}]
  %s8 = inlined_call_operand.vmem [shape: f32[1,128], index: 8, kind: input, shape index: {}, may-alias: {2,8}]
  %s9 = inlined_call_operand.vmem [shape: f32[1,128], index: 9, kind: input, shape index: {}, may-alias: {3,9}]
  %s10 = inlined_call_operand.vmem [shape: f32[16,128], index: 10, kind: output, shape index: {}, may-alias: {0,10}]
  %s11 = sld [smem:[#allocation0]]
  $region73: #{_lambda_.1} parent=0
    _
  %s13 = ssub.s32 1, %s11
  %s14 = scalar_select 0, %s13, %s11
  loop: start=0, step=1, limit=4
  $region2: #{_lambda_.1} parent=0 // loop_pre_header
    _
  $region3: #{_lambda_.1} parent=0 // loop_header
    %s16 = sphi 0, %s20
    %p17 = scmp.ge.s32.totalorder %s16, 4
    %s26 = sphi 0, %s28
    %s29 = sphi 0, %s26
    %s30 = sphi 0, %s29
    %s46 = sphi 0, %s30
    %s52 = sphi 0, %s54
    %s55 = sphi 0, %s52
    %s56 = sphi 0, %s55
    %s72 = sphi 0, %s56
    %s76 = sphi 0, %s76
    %s78 = sphi 0, %s76
    %s79 = sphi 0, %s78
    %s93 = sphi 0, %s79
    %s97 = sphi 0, %s97
    %s99 = sphi 0, %s97
    %s100 = sphi 0, %s99
    %s114 = sphi 0, %s100
    %s118 = sphi 0, %s118
    %s120 = sphi 0, %s118
    %s121 = sphi 0, %s120
    %s135 = sphi 0, %s121
    %s139 = sphi 0, %s139
    %s141 = sphi 0, %s139
    %s142 = sphi 0, %s141
    %s156 = sphi 0, %s142
    %s160 = sphi 0, %s160
    %s162 = sphi 0, %s160
    %s163 = sphi 0, %s162
    %s177 = sphi 0, %s163
    %s181 = sphi 0, %s181
    %s183 = sphi 0, %s181
    %s184 = sphi 0, %s183
    %s198 = sphi 0, %s184
    %s202 = sphi 0, %s202
    %s204 = sphi 0, %s202
    %s205 = sphi 0, %s204
    %s219 = sphi 0, %s205
    %s223 = sphi 0, %s223
    %s225 = sphi 0, %s223
    %s226 = sphi 0, %s225
    %s240 = sphi 0, %s226
    %s246 = sphi 0, %s248
    %s249 = sphi 0, %s246
    %s250 = sphi 0, %s249
    %s266 = sphi 0, %s250
  $region4: #{_lambda_.1} parent=0 // loop_header_branch
    %19 = sbr.rel (%p17) target = $region8
  $region5: #{_lambda_.1} parent=0 // loop_body
    %s21 = ssub.s32 %s16, 1
    %s22 = ssub.s32 %s16, 2
    %s23 = sadd.s32 %s16, 1
    %s24 = ssub.s32 %s16, %s23
    %p25 = scmp.eq.s32.totalorder %s24, 0
    %s27 = sadd.s32 %s26, 1
    %s28 = scalar_select %p25, %s26, %s27
    %p31 = pneg %p25
    %p32 = scmp.eq.s32.totalorder %s16, 1
    %p33 = por %p31, %p32
    %p34 = scmp.ne.s32.totalorder %s26, %s29
    %p35 = scmp.eq.s32.totalorder %s16, 0
    %p36 = por %p34, %p35
    %p37 = scmp.ne.s32.totalorder %s26, %s29
    %p38 = scmp.eq.s32.totalorder %s21, 1
    %p39 = por %p37, %p38
    %p40 = scmp.ne.s32.totalorder %s29, %s30
    %p41 = scmp.eq.s32.totalorder %s21, 0
    %p42 = por %p40, %p41
    %p43 = scmp.ne.s32.totalorder %s29, %s30
    %p44 = scmp.eq.s32.totalorder %s22, 1
    %p45 = por %p43, %p44
    %p47 = scmp.ne.s32.totalorder %s30, %s46
    %p48 = scmp.eq.s32.totalorder %s22, 0
    %p49 = por %p47, %p48
    %s50 = ssub.s32 %s16, %s23
    %p51 = scmp.eq.s32.totalorder %s50, 0
    %s53 = sadd.s32 %s52, 1
    %s54 = scalar_select %p51, %s52, %s53
    %p57 = pneg %p51
    %p58 = scmp.eq.s32.totalorder %s16, 1
    %p59 = por %p57, %p58
    %p60 = scmp.ne.s32.totalorder %s52, %s55
    %p61 = scmp.eq.s32.totalorder %s16, 0
    %p62 = por %p60, %p61
    %p63 = scmp.ne.s32.totalorder %s52, %s55
    %p64 = scmp.eq.s32.totalorder %s21, 1
    %p65 = por %p63, %p64
    %p66 = scmp.ne.s32.totalorder %s55, %s56
    %p67 = scmp.eq.s32.totalorder %s21, 0
    %p68 = por %p66, %p67
    %p69 = scmp.ne.s32.totalorder %s55, %s56
    %p70 = scmp.eq.s32.totalorder %s22, 1
    %p71 = por %p69, %p70
    %p73 = scmp.ne.s32.totalorder %s56, %s72
    %p74 = scmp.eq.s32.totalorder %s22, 0
    %p75 = por %p73, %p74
    %s77 = sadd.s32 %s76, 1
    %p80 = scmp.eq.s32.totalorder %s16, 1
    %p81 = scmp.ne.s32.totalorder %s76, %s78
    %p82 = scmp.eq.s32.totalorder %s16, 0
    %p83 = por %p81, %p82
    %p84 = scmp.ne.s32.totalorder %s76, %s78
    %p85 = scmp.eq.s32.totalorder %s21, 1
    %p86 = por %p84, %p85
    %p87 = scmp.ne.s32.totalorder %s78, %s79
    %p88 = scmp.eq.s32.totalorder %s21, 0
    %p89 = por %p87, %p88
    %p90 = scmp.ne.s32.totalorder %s78, %s79
    %p91 = scmp.eq.s32.totalorder %s22, 1
    %p92 = por %p90, %p91
    %p94 = scmp.ne.s32.totalorder %s79, %s93
    %p95 = scmp.eq.s32.totalorder %s22, 0
    %p96 = por %p94, %p95
    %s98 = sadd.s32 %s97, 1
    %p101 = scmp.eq.s32.totalorder %s16, 1
    %p102 = scmp.ne.s32.totalorder %s97, %s99
    %p103 = scmp.eq.s32.totalorder %s16, 0
    %p104 = por %p102, %p103
    %p105 = scmp.ne.s32.totalorder %s97, %s99
    %p106 = scmp.eq.s32.totalorder %s21, 1
    %p107 = por %p105, %p106
    %p108 = scmp.ne.s32.totalorder %s99, %s100
    %p109 = scmp.eq.s32.totalorder %s21, 0
    %p110 = por %p108, %p109
    %p111 = scmp.ne.s32.totalorder %s99, %s100
    %p112 = scmp.eq.s32.totalorder %s22, 1
    %p113 = por %p111, %p112
    %p115 = scmp.ne.s32.totalorder %s100, %s114
    %p116 = scmp.eq.s32.totalorder %s22, 0
    %p117 = por %p115, %p116
    %s119 = sadd.s32 %s118, 1
    %p122 = scmp.eq.s32.totalorder %s16, 1
    %p123 = scmp.ne.s32.totalorder %s118, %s120
    %p124 = scmp.eq.s32.totalorder %s16, 0
    %p125 = por %p123, %p124
    %p126 = scmp.ne.s32.totalorder %s118, %s120
    %p127 = scmp.eq.s32.totalorder %s21, 1
    %p128 = por %p126, %p127
    %p129 = scmp.ne.s32.totalorder %s120, %s121
    %p130 = scmp.eq.s32.totalorder %s21, 0
    %p131 = por %p129, %p130
    %p132 = scmp.ne.s32.totalorder %s120, %s121
    %p133 = scmp.eq.s32.totalorder %s22, 1
    %p134 = por %p132, %p133
    %p136 = scmp.ne.s32.totalorder %s121, %s135
    %p137 = scmp.eq.s32.totalorder %s22, 0
    %p138 = por %p136, %p137
    %s140 = sadd.s32 %s139, 1
    %p143 = scmp.eq.s32.totalorder %s16, 1
    %p144 = scmp.ne.s32.totalorder %s139, %s141
    %p145 = scmp.eq.s32.totalorder %s16, 0
    %p146 = por %p144, %p145
    %p147 = scmp.ne.s32.totalorder %s139, %s141
    %p148 = scmp.eq.s32.totalorder %s21, 1
    %p149 = por %p147, %p148
    %p150 = scmp.ne.s32.totalorder %s141, %s142
    %p151 = scmp.eq.s32.totalorder %s21, 0
    %p152 = por %p150, %p151
    %p153 = scmp.ne.s32.totalorder %s141, %s142
    %p154 = scmp.eq.s32.totalorder %s22, 1
    %p155 = por %p153, %p154
    %p157 = scmp.ne.s32.totalorder %s142, %s156
    %p158 = scmp.eq.s32.totalorder %s22, 0
    %p159 = por %p157, %p158
    %s161 = sadd.s32 %s160, 1
    %p164 = scmp.eq.s32.totalorder %s16, 1
    %p165 = scmp.ne.s32.totalorder %s160, %s162
    %p166 = scmp.eq.s32.totalorder %s16, 0
    %p167 = por %p165, %p166
    %p168 = scmp.ne.s32.totalorder %s160, %s162
    %p169 = scmp.eq.s32.totalorder %s21, 1
    %p170 = por %p168, %p169
    %p171 = scmp.ne.s32.totalorder %s162, %s163
    %p172 = scmp.eq.s32.totalorder %s21, 0
    %p173 = por %p171, %p172
    %p174 = scmp.ne.s32.totalorder %s162, %s163
    %p175 = scmp.eq.s32.totalorder %s22, 1
    %p176 = por %p174, %p175
    %p178 = scmp.ne.s32.totalorder %s163, %s177
    %p179 = scmp.eq.s32.totalorder %s22, 0
    %p180 = por %p178, %p179
    %s182 = sadd.s32 %s181, 1
    %p185 = scmp.eq.s32.totalorder %s16, 1
    %p186 = scmp.ne.s32.totalorder %s181, %s183
    %p187 = scmp.eq.s32.totalorder %s16, 0
    %p188 = por %p186, %p187
    %p189 = scmp.ne.s32.totalorder %s181, %s183
    %p190 = scmp.eq.s32.totalorder %s21, 1
    %p191 = por %p189, %p190
    %p192 = scmp.ne.s32.totalorder %s183, %s184
    %p193 = scmp.eq.s32.totalorder %s21, 0
    %p194 = por %p192, %p193
    %p195 = scmp.ne.s32.totalorder %s183, %s184
    %p196 = scmp.eq.s32.totalorder %s22, 1
    %p197 = por %p195, %p196
    %p199 = scmp.ne.s32.totalorder %s184, %s198
    %p200 = scmp.eq.s32.totalorder %s22, 0
    %p201 = por %p199, %p200
    %s203 = sadd.s32 %s202, 1
    %p206 = scmp.eq.s32.totalorder %s16, 1
    %p207 = scmp.ne.s32.totalorder %s202, %s204
    %p208 = scmp.eq.s32.totalorder %s16, 0
    %p209 = por %p207, %p208
    %p210 = scmp.ne.s32.totalorder %s202, %s204
    %p211 = scmp.eq.s32.totalorder %s21, 1
    %p212 = por %p210, %p211
    %p213 = scmp.ne.s32.totalorder %s204, %s205
    %p214 = scmp.eq.s32.totalorder %s21, 0
    %p215 = por %p213, %p214
    %p216 = scmp.ne.s32.totalorder %s204, %s205
    %p217 = scmp.eq.s32.totalorder %s22, 1
    %p218 = por %p216, %p217
    %p220 = scmp.ne.s32.totalorder %s205, %s219
    %p221 = scmp.eq.s32.totalorder %s22, 0
    %p222 = por %p220, %p221
    %s224 = sadd.s32 %s223, 1
    %p227 = scmp.eq.s32.totalorder %s16, 1
    %p228 = scmp.ne.s32.totalorder %s223, %s225
    %p229 = scmp.eq.s32.totalorder %s16, 0
    %p230 = por %p228, %p229
    %p231 = scmp.ne.s32.totalorder %s223, %s225
    %p232 = scmp.eq.s32.totalorder %s21, 1
    %p233 = por %p231, %p232
    %p234 = scmp.ne.s32.totalorder %s225, %s226
    %p235 = scmp.eq.s32.totalorder %s21, 0
    %p236 = por %p234, %p235
    %p237 = scmp.ne.s32.totalorder %s225, %s226
    %p238 = scmp.eq.s32.totalorder %s22, 1
    %p239 = por %p237, %p238
    %p241 = scmp.ne.s32.totalorder %s226, %s240
    %p242 = scmp.eq.s32.totalorder %s22, 0
    %p243 = por %p241, %p242
    %s244 = ssub.s32 %s16, %s23
    %p245 = scmp.eq.s32.totalorder %s244, 0
    %s247 = sadd.s32 %s246, 1
    %s248 = scalar_select %p245, %s246, %s247
    %p251 = pneg %p245
    %p252 = scmp.eq.s32.totalorder %s16, 1
    %p253 = por %p251, %p252
    %p254 = scmp.ne.s32.totalorder %s246, %s249
    %p255 = scmp.eq.s32.totalorder %s16, 0
    %p256 = por %p254, %p255
    %p257 = scmp.ne.s32.totalorder %s246, %s249
    %p258 = scmp.eq.s32.totalorder %s21, 1
    %p259 = por %p257, %p258
    %p260 = scmp.ne.s32.totalorder %s249, %s250
    %p261 = scmp.eq.s32.totalorder %s21, 0
    %p262 = por %p260, %p261
    %p263 = scmp.ne.s32.totalorder %s249, %s250
    %p264 = scmp.eq.s32.totalorder %s22, 1
    %p265 = por %p263, %p264
    %p267 = scmp.ne.s32.totalorder %s250, %s266
    %p268 = scmp.eq.s32.totalorder %s22, 0
    %p269 = por %p267, %p268
    %p270 = scmp.le.s32.totalorder 1, %s16
    %p271 = scmp.lt.s32.totalorder %s16, 3
    %p272 = pnand %p270, %p271
    %p273 = pneg %p272
    // Predicated region
    $region9: #{_lambda_.1} parent=5 // pred_check
      _
    $region10: #{_lambda_.1} parent=5 // pred_check_branch
      %275 = sbr.rel (%p272) target = $region12
    $region11: #{_lambda_.1} parent=5 // pred_region
      %s276 = ssub.s32 %s16, 1
      // Predicated region
      $region13: #{_lambda_.1} parent=11 // pred_check
        %p277 = pneg %p89
      $region14: #{_lambda_.1} parent=11 // pred_check_branch
        %279 = sbr.rel (%p277) target = $region16
      $region15: #{_lambda_.1} parent=11 // pred_region
        _
      $region16: #{_lambda_.1} parent=11 // pred_fallthru
        _
      // Predicated region
      $region17: #{_lambda_.1} parent=11 // pred_check
        %p280 = pneg %p110
      $region18: #{_lambda_.1} parent=11 // pred_check_branch
        %282 = sbr.rel (%p280) target = $region20
      $region19: #{_lambda_.1} parent=11 // pred_region
        _
      $region20: #{_lambda_.1} parent=11 // pred_fallthru
        _
      // Predicated region
      $region21: #{_lambda_.1} parent=11 // pred_check
        %p283 = pneg %p131
      $region22: #{_lambda_.1} parent=11 // pred_check_branch
        %285 = sbr.rel (%p283) target = $region24
      $region23: #{_lambda_.1} parent=11 // pred_region
        _
      $region24: #{_lambda_.1} parent=11 // pred_fallthru
        _
      // Predicated region
      $region25: #{_lambda_.1} parent=11 // pred_check
        %p286 = pneg %p152
      $region26: #{_lambda_.1} parent=11 // pred_check_branch
        %288 = sbr.rel (%p286) target = $region28
      $region27: #{_lambda_.1} parent=11 // pred_region
        _
      $region28: #{_lambda_.1} parent=11 // pred_fallthru
        _
      // Predicated region
      $region29: #{_lambda_.1} parent=11 // pred_check
        %p289 = pneg %p173
      $region30: #{_lambda_.1} parent=11 // pred_check_branch
        %291 = sbr.rel (%p289) target = $region32
      $region31: #{_lambda_.1} parent=11 // pred_region
        _
      $region32: #{_lambda_.1} parent=11 // pred_fallthru
        _
      // Predicated region
      $region33: #{_lambda_.1} parent=11 // pred_check
        %p292 = pneg %p194
      $region34: #{_lambda_.1} parent=11 // pred_check_branch
        %294 = sbr.rel (%p292) target = $region36
      $region35: #{_lambda_.1} parent=11 // pred_region
        _
      $region36: #{_lambda_.1} parent=11 // pred_fallthru
        _
      // Predicated region
      $region37: #{_lambda_.1} parent=11 // pred_check
        %p295 = pneg %p215
      $region38: #{_lambda_.1} parent=11 // pred_check_branch
        %297 = sbr.rel (%p295) target = $region40
      $region39: #{_lambda_.1} parent=11 // pred_region
        _
      $region40: #{_lambda_.1} parent=11 // pred_fallthru
        _
      // Predicated region
      $region41: #{_lambda_.1} parent=11 // pred_check
        %p298 = pneg %p236
      $region42: #{_lambda_.1} parent=11 // pred_check_branch
        %300 = sbr.rel (%p298) target = $region44
      $region43: #{_lambda_.1} parent=11 // pred_region
        _
      $region44: #{_lambda_.1} parent=11 // pred_fallthru
        _
    $region12: #{_lambda_.1} parent=5 // pred_fallthru
      _
    %p301 = scmp.lt.s32.totalorder %s16, 2
    // Predicated region
    $region45: #{_lambda_.1} parent=5 // pred_check
      %p302 = pneg %p301
    $region46: #{_lambda_.1} parent=5 // pred_check_branch
      %304 = sbr.rel (%p302) target = $region48
    $region47: #{_lambda_.1} parent=5 // pred_region
      // Predicated region
      $region49: #{_lambda_.1} parent=47 // pred_check
        %p305 = pneg %p36
      $region50: #{_lambda_.1} parent=47 // pred_check_branch
        %307 = sbr.rel (%p305) target = $region52
      $region51: #{_lambda_.1} parent=47 // pred_region
        %p308 = scmp.lt.s32.totalorder %s16, 1
        %s309 = scalar_select %p308, %s16, 1
        %s310 = smul.addr %s309, 8
        %s311 = scalar_lea.vmem %s0, %s310
      $region52: #{_lambda_.1} parent=47 // pred_fallthru
        _
      // Predicated region
      $region53: #{_lambda_.1} parent=47 // pred_check
        %p312 = pneg %p62
      $region54: #{_lambda_.1} parent=47 // pred_check_branch
        %314 = sbr.rel (%p312) target = $region56
      $region55: #{_lambda_.1} parent=47 // pred_region
        %p315 = scmp.lt.s32.totalorder %s16, 1
        %s316 = scalar_select %p315, %s16, 1
        %s317 = smul.addr %s316, 8
        %s318 = scalar_lea.vmem %s1, %s317
      $region56: #{_lambda_.1} parent=47 // pred_fallthru
        _
    $region48: #{_lambda_.1} parent=5 // pred_fallthru
      _
    %p319 = scmp.le.s32.totalorder 1, %s16
    %p320 = scmp.lt.s32.totalorder %s16, 3
    %p321 = pnand %p319, %p320
    %p322 = pneg %p321
    // Predicated region
    $region57: #{_lambda_.1} parent=5 // pred_check
      _
    $region58: #{_lambda_.1} parent=5 // pred_check_branch
      %324 = sbr.rel (%p321) target = $region60
    $region59: #{_lambda_.1} parent=5 // pred_region
      %s325 = ssub.s32 %s16, 1
      %p326 = scmp.lt.s32.totalorder %s21, 1
      %s327 = scalar_select %p326, %s21, 1
      %s328 = smul.addr %s327, 8
      %s329 = scalar_lea.vmem %s0, %s328
      %p330 = pneg %p42
      %p331 = pneg %p39
      %p332 = scmp.lt.s32.totalorder %s21, 1
      %s333 = scalar_select %p332, %s21, 1
      %s334 = smul.addr %s333, 8
      %s335 = scalar_lea.vmem %s1, %s334
      %p336 = pneg %p68
      %p337 = pneg %p65
      %p338 = pneg %p89
      %p339 = pneg %p86
      %p340 = pneg %p110
      %p341 = pneg %p107
      %p342 = pneg %p131
      %p343 = pneg %p128
      %p344 = pneg %p152
      %p345 = pneg %p149
      %p346 = pneg %p173
      %p347 = pneg %p170
      %p348 = pneg %p194
      %p349 = pneg %p191
      %p350 = pneg %p215
      %p351 = pneg %p212
      %p352 = pneg %p236
      %p353 = pneg %p233
      %p354 = pneg %p262
      %p355 = pneg %p259
      %p356 = scmp.lt.s32.totalorder %s21, 1
      %s357 = scalar_select %p356, %s21, 1
      %s358 = smul.addr %s357, 8
      %s359 = scalar_lea.vmem %s10, %s358
      %p360 = scmp.lt.s32.totalorder %s21, 1
      %s361 = scalar_select %p360, %s21, 1
      %s362 = smul.addr %s361, 8
      %s363 = scalar_lea.vmem %s0, %s362
      %p364 = scmp.lt.s32.totalorder %s21, 1
      %s365 = scalar_select %p364, %s21, 1
      %s366 = smul.addr %s365, 8
      %s367 = scalar_lea.vmem %s1, %s366
      %p368 = scmp.lt.s32.totalorder %s21, 1
      %s369 = scalar_select %p368, %s21, 1
      %s370 = smul.addr %s369, 8
      %s371 = scalar_lea.vmem %s10, %s370
      %v372 = vld [vmem:[%s363] sm:$0xff]
      %v373 = vld [vmem:[%s367] sm:$0xff]
      %v374 = vadd.f32 %v372, %v373
      %v375 = vlaneseq
      %v376 = vand.u32 %v375, 127
      %vm377 = vcmp.lt.s32.totalorder %v376, 32
      %v378 = vld [vmem:[%s2] sm:$0x1]
      %v379 = vld [vmem:[%s3] sm:$0x1]
      %380 = vadd.xlane.f32.xlu0 %v374
      %v381 = vpop.xlane.xlu0 %380
      %v382 = vmul.f32 %v381, 0.03125
      %v383 = vsub.f32 %v374, %v382
      %v384 = vsel %vm377, %v383, 0.0
      %v385 = vmul.f32 %v384, %v384
      %386 = vadd.xlane.f32.xlu0 %v385
      %v387 = vpop.xlane.xlu0 %386
      %v388 = vmul.f32 %v387, 0.03125
      %v389 = vadd.f32 %v388, 1e-05
      %v390 = vrsqrt.pop %v389
      %v391 = vmul.f32 %v390, %v389
      %v392 = vmul.f32 %v391, %v390
      %v393 = vmul.f32 0.5, %v392
      %v394 = vsub.f32 1.5, %v393
      %v395 = vmul.f32 %v390, %v394
      %vm396 = vweird.f32 %v389
      %vm397 = vweird.f32 %v390
      %vm398 = vmor %vm396, %vm397
      %v399 = vsel %vm398, %v390, %v395
      %v400 = vmul.f32 %v384, %v399
      %v402 = vperm.slane %v378, 0
      %v404 = vmul.f32 %v400, %v402
      %v406 = vperm.slane %v379, 0
      %v408 = vadd.f32 %v404, %v406
      %v409 = vpack.c.bf16 %v408, %v408
      %v410 = vld [vmem:[%s4] sm:$0xf]
      %v411 = vld [vmem:[%s4 + $0x4] sm:$0xf]
      %v412 = vld [vmem:[%s4 + $0x8] sm:$0xf]
      %v413 = vld [vmem:[%s4 + $0xc] sm:$0xf]
      %v414 = vld [vmem:[%s4 + $0x10] sm:$0xf]
      %v415 = vld [vmem:[%s4 + $0x14] sm:$0xf]
      %v416 = vld [vmem:[%s4 + $0x18] sm:$0xf]
      %v417 = vld [vmem:[%s4 + $0x1c] sm:$0xf]
      %v418 = vld [vmem:[%s4 + $0x20] sm:$0xf]
      %v419 = vld [vmem:[%s4 + $0x24] sm:$0xf]
      %v420 = vld [vmem:[%s4 + $0x28] sm:$0xf]
      %v421 = vld [vmem:[%s4 + $0x2c] sm:$0xf]
      %v422 = vld [vmem:[%s4 + $0x30] sm:$0xf]
      %v423 = vld [vmem:[%s4 + $0x34] sm:$0xf]
      %v424 = vld [vmem:[%s4 + $0x38] sm:$0xf]
      %v425 = vld [vmem:[%s4 + $0x3c] sm:$0xf]
      %v442 = vunpack.c.l.b16 %v410
      %v443 = vunpack.c.l.b16 %v411
      %v444 = vunpack.c.l.b16 %v412
      %v445 = vunpack.c.l.b16 %v413
      %v446 = vunpack.c.l.b16 %v414
      %v447 = vunpack.c.l.b16 %v415
      %v448 = vunpack.c.l.b16 %v416
      %v449 = vunpack.c.l.b16 %v417
      %v450 = vunpack.c.l.b16 %v418
      %v451 = vunpack.c.l.b16 %v419
      %v452 = vunpack.c.l.b16 %v420
      %v453 = vunpack.c.l.b16 %v421
      %v454 = vunpack.c.l.b16 %v422
      %v455 = vunpack.c.l.b16 %v423
      %v456 = vunpack.c.l.b16 %v424
      %v457 = vunpack.c.l.b16 %v425
      %v458 = vpack.c.b16 %v443, %v442
      %v459 = vpack.c.b16 %v445, %v444
      %v460 = vpack.c.b16 %v447, %v446
      %v461 = vpack.c.b16 %v449, %v448
      %v462 = vpack.c.b16 %v451, %v450
      %v463 = vpack.c.b16 %v453, %v452
      %v464 = vpack.c.b16 %v455, %v454
      %v465 = vpack.c.b16 %v457, %v456
      %474 = vmatpush.bf16.msra.mxu0 %v465
      %475 = vmatpush.bf16.msra.mxu0 %v464
      %476 = vmatpush.bf16.msra.mxu0 %v463
      %477 = vmatpush.bf16.msra.mxu0 %v462
      %478 = vmatpush.bf16.msra.mxu0 %v461
      %479 = vmatpush.bf16.msra.mxu0 %v460
      %480 = vmatpush.bf16.msra.mxu0 %v459
      %481 = vmatpush.bf16.msra.mxu0 %v458
      %482 = vmatmul.bf16.gmra.mxu0 %v409
      %v483 = vpop.f32.mrf.mxu0
      %v484 = vadd.f32 0.0, %v483
      %v485 = vpop.f32.mrf.mxu0
      %486 = vdwg.mxu0
      %v487 = vpack.c.bf16 %v484, %v484
      %v488 = vld [vmem:[%s5] sm:$0x1]
      %v490 = vpack.i.b16 %v488, %v488
      %v492 = vperm.slane %v490, 0
      %v493 = vunpack.c.l.bf16 %v487
      %v494 = vunpack.c.l.bf16 %v492
      %v495 = vadd.f32 %v493, %v494
      %v496 = vpack.c.bf16 %v495, %v495
      %v497 = vunpack.c.l.bf16 %v496
      %v498 = vmul.f32 %v497, 0.5
      %v499 = vpack.c.bf16 %v498, %v498
      %v500 = vmul.f32 %v497, 0.70703125
      %v501 = vpack.c.bf16 %v500, %v500
      %v502 = vunpack.c.l.bf16 %v501
      %v503 = vmul.f32 %v502, %v502
      %v504 = vmin.f32 16.0, %v503
      %v505 = vmul.f32 %v504, 2.1237322e-06
      %v506 = vadd.f32 %v505, 0.00028619796
      %v507 = vmul.f32 %v504, %v506
      %v508 = vadd.f32 %v507, 0.0036580483
      %v509 = vmul.f32 %v504, %v508
      %v510 = vadd.f32 %v509, 0.05243302
      %v511 = vmul.f32 %v504, %v510
      %v512 = vadd.f32 %v511, 0.18741608
      %v513 = vmul.f32 %v504, %v512
      %v514 = vadd.f32 %v513, 1.1283791
      %v515 = vmul.f32 %v502, %v514
      %v516 = vmul.f32 %v504, 3.8918573e-05
      %v517 = vadd.f32 %v516, 0.001143296
      %v518 = vmul.f32 %v504, %v517
      %v519 = vadd.f32 %v518, 0.014752088
      %v520 = vmul.f32 %v504, %v519
      %v521 = vadd.f32 %v520, 0.112945676
      %v522 = vmul.f32 %v504, %v521
      %v523 = vadd.f32 %v522, 0.4994258
      %v524 = vmul.f32 %v504, %v523
      %v525 = vadd.f32 %v524, 1.0
      %v526 = vrcp.pop %v525
      %v527 = vmul.f32 %v525, %v526
      %v528 = vsub.f32 1.0, %v527
      %v529 = vmul.f32 %v526, %v528
      %v530 = vadd.f32 %v526, %v529
      %vm531 = vweird.f32 %v525
      %vm532 = vweird.f32 %v526
      %vm533 = vmor %vm531, %vm532
      %v534 = vsel %vm533, %v526, %v530
      %v535 = vand.u32 2147483647, %v525
      %vm536 = vcmp.eq.f32.partialorder %v535, 8.507059e+37
      %v537 = vand.u32 %v525, 2147483648
      %v538 = vor.u32 1.1754944e-38, %v537
      %v539 = vsel %vm536, %v538, %v534
      %v540 = vmul.f32 %v515, %v539
      %v541 = vmin.f32 %v540, 1.0
      %v542 = vmax.f32 %v541, -1.0
      %v543 = vpack.c.bf16 %v542, %v542
      %v544 = vunpack.c.l.bf16 %v543
      %v545 = vadd.f32 %v544, 1.0
      %v546 = vpack.c.bf16 %v545, %v545
      %v547 = vunpack.c.l.bf16 %v499
      %v548 = vunpack.c.l.bf16 %v546
      %v549 = vmul.f32 %v547, %v548
      %v550 = vpack.c.bf16 %v549, %v549
      %v551 = vld [vmem:[%s6] sm:$0xf]
      %v552 = vld [vmem:[%s6 + $0x4] sm:$0xf]
      %v553 = vld [vmem:[%s6 + $0x8] sm:$0xf]
      %v554 = vld [vmem:[%s6 + $0xc] sm:$0xf]
      %v555 = vld [vmem:[%s6 + $0x10] sm:$0xf]
      %v556 = vld [vmem:[%s6 + $0x14] sm:$0xf]
      %v557 = vld [vmem:[%s6 + $0x18] sm:$0xf]
      %v558 = vld [vmem:[%s6 + $0x1c] sm:$0xf]
      %v559 = vld [vmem:[%s6 + $0x20] sm:$0xf]
      %v560 = vld [vmem:[%s6 + $0x24] sm:$0xf]
      %v561 = vld [vmem:[%s6 + $0x28] sm:$0xf]
      %v562 = vld [vmem:[%s6 + $0x2c] sm:$0xf]
      %v563 = vld [vmem:[%s6 + $0x30] sm:$0xf]
      %v564 = vld [vmem:[%s6 + $0x34] sm:$0xf]
      %v565 = vld [vmem:[%s6 + $0x38] sm:$0xf]
      %v566 = vld [vmem:[%s6 + $0x3c] sm:$0xf]
      %v567 = vld [vmem:[%s7] sm:$0x1]
      %v569 = vperm.slane %v567, 0
      %v587 = vunpack.c.l.b16 %v551
      %v588 = vunpack.c.l.b16 %v552
      %v589 = vunpack.c.l.b16 %v553
      %v590 = vunpack.c.l.b16 %v554
      %v591 = vunpack.c.l.b16 %v555
      %v592 = vunpack.c.l.b16 %v556
      %v593 = vunpack.c.l.b16 %v557
      %v594 = vunpack.c.l.b16 %v558
      %v595 = vunpack.c.l.b16 %v559
      %v596 = vunpack.c.l.b16 %v560
      %v597 = vunpack.c.l.b16 %v561
      %v598 = vunpack.c.l.b16 %v562
      %v599 = vunpack.c.l.b16 %v563
      %v600 = vunpack.c.l.b16 %v564
      %v601 = vunpack.c.l.b16 %v565
      %v602 = vunpack.c.l.b16 %v566
      %v603 = vpack.c.b16 %v588, %v587
      %v604 = vpack.c.b16 %v590, %v589
      %v605 = vpack.c.b16 %v592, %v591
      %v606 = vpack.c.b16 %v594, %v593
      %v607 = vpack.c.b16 %v596, %v595
      %v608 = vpack.c.b16 %v598, %v597
      %v609 = vpack.c.b16 %v600, %v599
      %v610 = vpack.c.b16 %v602, %v601
      %619 = vmatpush.bf16.msra.mxu0 %v610
      %620 = vmatpush.bf16.msra.mxu0 %v609
      %621 = vmatpush.bf16.msra.mxu0 %v608
      %622 = vmatpush.bf16.msra.mxu0 %v607
      %623 = vmatpush.bf16.msra.mxu0 %v606
      %624 = vmatpush.bf16.msra.mxu0 %v605
      %625 = vmatpush.bf16.msra.mxu0 %v604
      %626 = vmatpush.bf16.msra.mxu0 %v603
      %627 = vmatmul.bf16.gmra.mxu0 %v550
      %v628 = vpop.f32.mrf.mxu0
      %v629 = vadd.f32 %v569, %v628
      %v630 = vpop.f32.mrf.mxu0
      %631 = vdwg.mxu0
      %v632 = vadd.f32 %v408, %v629
      %v633 = vld [vmem:[%s8] sm:$0x1]
      %v634 = vld [vmem:[%s9] sm:$0x1]
      %635 = vadd.xlane.f32.xlu0 %v632
      %v636 = vpop.xlane.xlu0 %635
      %v637 = vmul.f32 %v636, 0.03125
      %v638 = vsub.f32 %v632, %v637
      %v639 = vsel %vm377, %v638, 0.0
      %v640 = vmul.f32 %v639, %v639
      %641 = vadd.xlane.f32.xlu0 %v640
      %v642 = vpop.xlane.xlu0 %641
      %v643 = vmul.f32 %v642, 0.03125
      %v644 = vadd.f32 %v643, 1e-05
      %v645 = vrsqrt.pop %v644
      %v646 = vmul.f32 %v645, %v644
      %v647 = vmul.f32 %v646, %v645
      %v648 = vmul.f32 0.5, %v647
      %v649 = vsub.f32 1.5, %v648
      %v650 = vmul.f32 %v645, %v649
      %vm651 = vweird.f32 %v644
      %vm652 = vweird.f32 %v645
      %vm653 = vmor %vm651, %vm652
      %v654 = vsel %vm653, %v645, %v650
      %v655 = vmul.f32 %v639, %v654
      %v657 = vperm.slane %v633, 0
      %v659 = vmul.f32 %v655, %v657
      %v661 = vperm.slane %v634, 0
      %v663 = vadd.f32 %v659, %v661
      %664 = vst [vmem:[%s371] sm:$0xff] %v663
      %p665 = scmp.lt.s32.totalorder %s21, 1
      %s666 = scalar_select %p665, %s21, 1
      %s667 = smul.addr %s666, 8
      %s668 = scalar_lea.vmem %s10, %s667
      // Predicated region
      $region61: #{_lambda_.1} parent=59 // pred_check
        %p669 = pneg %p259
      $region62: #{_lambda_.1} parent=59 // pred_check_branch
        %671 = sbr.rel (%p669) target = $region64
      $region63: #{_lambda_.1} parent=59 // pred_region
        _
      $region64: #{_lambda_.1} parent=59 // pred_fallthru
        _
    $region60: #{_lambda_.1} parent=5 // pred_fallthru
      _
    %p672 = scmp.le.s32.totalorder 2, %s16
    // Predicated region
    $region65: #{_lambda_.1} parent=5 // pred_check
      %p673 = pneg %p672
    $region66: #{_lambda_.1} parent=5 // pred_check_branch
      %675 = sbr.rel (%p673) target = $region68
    $region67: #{_lambda_.1} parent=5 // pred_region
      %s676 = ssub.s32 %s16, 2
      // Predicated region
      $region69: #{_lambda_.1} parent=67 // pred_check
        %p677 = pneg %p265
      $region70: #{_lambda_.1} parent=67 // pred_check_branch
        %679 = sbr.rel (%p677) target = $region72
      $region71: #{_lambda_.1} parent=67 // pred_region
        %p680 = scmp.lt.s32.totalorder %s22, 1
        %s681 = scalar_select %p680, %s22, 1
        %s682 = smul.addr %s681, 8
        %s683 = scalar_lea.vmem %s10, %s682
      $region72: #{_lambda_.1} parent=67 // pred_fallthru
        _
    $region68: #{_lambda_.1} parent=5 // pred_fallthru
      _
  $region6: #{_lambda_.1} parent=0 // loop_footer
    %s20 = sadd.s32 1, %s16
  $region7: #{_lambda_.1} parent=0 // loop_footer_branch
    %15 = sbr.rel target = $region3
  $region8: #{_lambda_.1} parent=0 // loop_exit
    _

</llo_original>
